<compile_context>
chip_gen: v5e
topology: v5e:2x2
jax: 0.10.0
libtpu: 0.0.40
codegen_flags: <defaults>
</compile_context>

<pallas_src>
import functools
import math

import jax
import jax.numpy as jnp
from jax import lax
from jax.experimental import pallas as pl
from jax.experimental.pallas import tpu as pltpu

_SQRT_HALF = 1.0 / math.sqrt(2.0)
_FULL_K_MAX = 2048  # 128-aligned reduction dims up to this use the no-accumulator path


def _round_up(a, b):
    return (a + b - 1) // b * b


def _geglu_kernel_fullk(x_ref, wv_ref, wg_ref, bv_ref, bg_ref, o_ref):
    # x_ref: (tm, k_p); wv/wg: (k_p, tn); bv/bg: (1, tn) f32; o_ref: (tm, tn).
    x = x_ref[...]
    v = jnp.dot(x, wv_ref[...], preferred_element_type=jnp.float32) + bv_ref[...]
    g = jnp.dot(x, wg_ref[...], preferred_element_type=jnp.float32) + bg_ref[...]
    # Exact (erf) GELU, multiplies fused: v * gelu(g) = 0.5*v*g*(1+erf(g/sqrt2)).
    o_ref[...] = (0.5 * v * g * (1.0 + lax.erf(g * _SQRT_HALF))).astype(o_ref.dtype)


def _geglu_kernel_ksplit(x_ref, wv_ref, wg_ref, bv_ref, bg_ref, o_ref,
                         acc_v, acc_g):
    # Fallback for very large dim_in: K grid axis with f32 VMEM accumulators.
    k = pl.program_id(2)

    @pl.when(k == 0)
    def _():
        acc_v[...] = jnp.zeros_like(acc_v)
        acc_g[...] = jnp.zeros_like(acc_g)

    x = x_ref[...]
    acc_v[...] += jnp.dot(x, wv_ref[...], preferred_element_type=jnp.float32)
    acc_g[...] += jnp.dot(x, wg_ref[...], preferred_element_type=jnp.float32)

    @pl.when(k == pl.num_programs(2) - 1)
    def _():
        v = acc_v[...] + bv_ref[...]
        g = acc_g[...] + bg_ref[...]
        o_ref[...] = (0.5 * v * g * (1.0 + lax.erf(g * _SQRT_HALF))).astype(o_ref.dtype)


@functools.partial(jax.jit, static_argnames=("tm", "tn", "tk", "compute_dtype"))
def geglu(x, w, b, *, tm=1024, tn=512, tk=512, compute_dtype=jnp.bfloat16):
    """GEGLU forward.

    x: (..., dim_in), w: (dim_in, 2*dim_out)  (= torch weight.T), b: (2*dim_out,)
    compute_dtype: dtype fed to the MXU (bf16 default; pass jnp.float32 for the
    bit-faithful reference path).  Bias add + GELU are always f32.
    For zero per-call weight prep, pre-cast w to compute_dtype at load time and
    use 128-multiple dim_in / dim_out.
    """
    orig_shape = x.shape
    out_dtype = x.dtype
    dim_in = orig_shape[-1]
    two_n = w.shape[1]
    dim_out = two_n // 2
    assert w.shape[0] == dim_in and two_n == 2 * dim_out and b.shape == (two_n,)

    x2 = x.reshape(-1, dim_in)
    m = x2.shape[0]

    cdt = jnp.dtype(compute_dtype)
    cdt_size = cdt.itemsize
    out_size = jnp.dtype(out_dtype).itemsize

    # ---- Tile plan: clamp to the problem, then pad the problem up to tiles ----
    m_aligned = _round_up(m, 8)
    n_aligned = _round_up(dim_out, 128)
    k_aligned = _round_up(dim_in, 128)

    tm = min(tm, m_aligned)                       # multiple of 8
    tn = min(tn, n_aligned)                       # multiple of 128
    full_k = k_aligned <= _FULL_K_MAX
    tk = k_aligned if full_k else min(tk, k_aligned)

    m_p = _round_up(m, tm)
    n_p = _round_up(n_aligned, tn)
    k_p = _round_up(k_aligned, tk)
    n_tiles = n_p // tn

    # ---- Operand prep (no-op for 128-aligned dims & matching dtype) ----
    x2 = x2.astype(cdt)
    if m_p != m or k_p != dim_in:
        x2 = jnp.pad(x2, ((0, m_p - m), (0, k_p - dim_in)))

    # Fused weight layout: columns [0, n_p) = value path, [n_p, 2*n_p) = gate.
    w = w.astype(cdt)
    if k_p != dim_in or n_p != dim_out:
        w_v = jnp.pad(w[:, :dim_out], ((0, k_p - dim_in), (0, n_p - dim_out)))
        w_g = jnp.pad(w[:, dim_out:], ((0, k_p - dim_in), (0, n_p - dim_out)))
        w = jnp.concatenate([w_v, w_g], axis=1)
    b = b.astype(jnp.float32)
    if n_p != dim_out:
        b = jnp.concatenate([jnp.pad(b[:dim_out], (0, n_p - dim_out)),
                             jnp.pad(b[dim_out:], (0, n_p - dim_out))])
    b = b.reshape(1, 2 * n_p)

    cost = pl.CostEstimate(
        flops=2 * 2 * m * dim_in * dim_out,       # two matmuls
        transcendentals=m * dim_out,              # erf
        bytes_accessed=(x2.size * cdt_size + w.size * cdt_size + b.size * 4
                        + m_p * n_p * out_size),
    )

    buf = 2  # double buffering
    if full_k:
        grid = (m_p // tm, n_p // tn)
        in_specs = [
            pl.BlockSpec((tm, k_p), lambda i, j: (i, 0)),              # x tile
            pl.BlockSpec((k_p, tn), lambda i, j: (0, j)),              # value-path W
            pl.BlockSpec((k_p, tn), lambda i, j: (0, j + n_tiles)),    # gate-path W
            pl.BlockSpec((1, tn), lambda i, j: (0, j)),                # value bias
            pl.BlockSpec((1, tn), lambda i, j: (0, j + n_tiles)),      # gate bias
        ]
        out_specs = pl.BlockSpec((tm, tn), lambda i, j: (i, j))
        scratch_shapes = []
        kernel = _geglu_kernel_fullk
        semantics = ("parallel", "parallel")
        vmem_est = buf * (tm * k_p * cdt_size            # x tile
                          + 2 * k_p * tn * cdt_size      # w_v / w_g tiles
                          + tm * tn * out_size           # output tile
                          + 2 * 8 * tn * 4)              # bias rows (sublane-padded)
    else:
        grid = (m_p // tm, n_p // tn, k_p // tk)
        in_specs = [
            pl.BlockSpec((tm, tk), lambda i, j, k: (i, k)),
            pl.BlockSpec((tk, tn), lambda i, j, k: (k, j)),
            pl.BlockSpec((tk, tn), lambda i, j, k: (k, j + n_tiles)),
            pl.BlockSpec((1, tn), lambda i, j, k: (0, j)),
            pl.BlockSpec((1, tn), lambda i, j, k: (0, j + n_tiles)),
        ]
        out_specs = pl.BlockSpec((tm, tn), lambda i, j, k: (i, j))
        scratch_shapes = [pltpu.VMEM((tm, tn), jnp.float32),
                          pltpu.VMEM((tm, tn), jnp.float32)]
        kernel = _geglu_kernel_ksplit
        semantics = ("parallel", "parallel", "arbitrary")
        vmem_est = (buf * (tm * tk * cdt_size + 2 * tk * tn * cdt_size
                           + tm * tn * out_size + 2 * 8 * tn * 4)
                    + 2 * tm * tn * 4)

    # Budget VMEM from the actual tile plan; cap at 64 MiB so the plan stays
    # valid on v7x (64 MiB / TensorCore) while still exceeding the 32 MiB
    # scoped default when the large tiles need it.
    vmem_limit = int(min(max(vmem_est * 5 // 4 + (4 << 20), 32 << 20), 64 << 20))

    out = pl.pallas_call(
        kernel,
        out_shape=jax.ShapeDtypeStruct((m_p, n_p), out_dtype),
        grid_spec=pltpu.PrefetchScalarGridSpec(
            num_scalar_prefetch=0,
            grid=grid,
            in_specs=in_specs,
            out_specs=out_specs,
            scratch_shapes=scratch_shapes,
        ),
        compiler_params=pltpu.CompilerParams(
            dimension_semantics=semantics,
            vmem_limit_bytes=vmem_limit,
        ),
        cost_estimate=cost,
    )(x2, w, w, b, b)     # fused weight & bias passed twice, halves picked by index_map

    out = out[:m, :dim_out]
    return out.reshape(*orig_shape[:-1], dim_out)


def geglu_ref(x, w, b):
    z = jnp.dot(x, w, preferred_element_type=jnp.float32,
                precision=lax.Precision.HIGHEST) + b
    v, g = jnp.split(z, 2, axis=-1)
    return (v * jax.nn.gelu(g, approximate=False)).astype(x.dtype)


if __name__ == "__main__":
    def make_inputs(key, batch, seq, dim_in, dim_out):
        kx, kw, kb = jax.random.split(key, 3)
        x = jax.random.normal(kx, (batch, seq, dim_in), dtype=jnp.float32)
        # PyTorch Linear stores weight as (2*dim_out, dim_in); we hold its
        # transpose directly.  Kaiming-uniform-style bound like nn.Linear.
        bound = 1.0 / math.sqrt(dim_in)
        w = jax.random.uniform(kw, (dim_in, 2 * dim_out), jnp.float32, -bound, bound)
        b = jax.random.uniform(kb, (2 * dim_out,), jnp.float32, -bound, bound)
        return x, w, b

    # Case 1: small shapes, f32 compute path — must match the exact reference.
    x, w, b = make_inputs(jax.random.PRNGKey(0), 2, 8, 32, 32)
    out = jax.block_until_ready(geglu(x, w, b, compute_dtype=jnp.float32))
    ref = geglu_ref(x, w, b)
    assert out.shape == (2, 8, 32)
    assert jnp.allclose(out, ref, atol=1e-4, rtol=1e-4), "f32 path mismatch"

    # Case 2: ragged shapes (M=21, dim_out=40, dim_in=48) exercising the
    # pad-up tail handling.
    x2, w2, b2 = make_inputs(jax.random.PRNGKey(1), 3, 7, 48, 40)
    out2 = jax.block_until_ready(geglu(x2, w2, b2, compute_dtype=jnp.float32))
    ref2 = geglu_ref(x2, w2, b2)
    assert out2.shape == (3, 7, 40)
    assert jnp.allclose(out2, ref2, atol=1e-4, rtol=1e-4), "ragged path mismatch"

    # Case 3: 128-aligned dims, default bf16 MXU path (zero per-call weight
    # reshaping — only the dtype cast).  Loosened tolerance vs f32 reference.
    x3, w3, b3 = make_inputs(jax.random.PRNGKey(2), 4, 64, 256, 128)
    out3 = jax.block_until_ready(geglu(x3, w3, b3))
    ref3 = geglu_ref(x3, w3, b3)
    assert out3.shape == (4, 64, 128)
    assert jnp.allclose(out3, ref3, atol=3e-2, rtol=3e-2), "bf16 path mismatch"

    # Case 4: dim_in > 2048 exercises the K-split fallback kernel (f32 path).
    x4, w4, b4 = make_inputs(jax.random.PRNGKey(3), 2, 8, 2304, 64)
    out4 = jax.block_until_ready(geglu(x4, w4, b4, compute_dtype=jnp.float32))
    ref4 = geglu_ref(x4, w4, b4)
    assert out4.shape == (2, 8, 64)
    assert jnp.allclose(out4, ref4, atol=1e-3, rtol=1e-3), "K-split path mismatch"

    print("KERNEL_OK")
</pallas_src>

<mosaic_0001>
module attributes {stable_mosaic.version = 11 : i64} {
  func.func @_geglu_kernel_fullk(%arg0: i32, %arg1: i32, %arg2: memref<16x128xf32, #tpu.memory_space<vmem>>, %arg3: memref<128x128xf32, #tpu.memory_space<vmem>>, %arg4: memref<128x128xf32, #tpu.memory_space<vmem>>, %arg5: memref<1x128xf32, #tpu.memory_space<vmem>>, %arg6: memref<1x128xf32, #tpu.memory_space<vmem>>, %arg7: memref<16x128xf32, #tpu.memory_space<vmem>>) attributes {dimension_semantics = [#tpu.dimension_semantics<parallel>, #tpu.dimension_semantics<parallel>], iteration_bounds = array<i64: 1, 1>, scalar_prefetch = 0 : i64, scratch_operands = 0 : i64, tpu.core_type = #tpu.core_type<tc>, window_params = [{transform_indices = @transform_0, window_bounds = array<i64: 16, 128>}, {transform_indices = @transform_1, window_bounds = array<i64: 128, 128>}, {transform_indices = @transform_2, window_bounds = array<i64: 128, 128>}, {transform_indices = @transform_3, window_bounds = array<i64: 1, 128>}, {transform_indices = @transform_4, window_bounds = array<i64: 1, 128>}, {transform_indices = @transform_5, window_bounds = array<i64: 16, 128>}]} {
    %c0 = arith.constant 0 : index
    %c0_0 = arith.constant 0 : index
    %0 = vector.load %arg2[%c0, %c0_0] : memref<16x128xf32, #tpu.memory_space<vmem>>, vector<16x128xf32>
    %c0_1 = arith.constant 0 : index
    %c0_2 = arith.constant 0 : index
    %1 = vector.load %arg3[%c0_1, %c0_2] : memref<128x128xf32, #tpu.memory_space<vmem>>, vector<128x128xf32>
    %cst = arith.constant dense<0.000000e+00> : vector<16x128xf32>
    %2 = tpu.matmul %0, %1, %cst {dimension_numbers = #tpu.dot_dimension_numbers<[1], [0], [0], [1], [0, 0, 1, 1], [], []>} : vector<16x128xf32>, vector<128x128xf32>, vector<16x128xf32> -> vector<16x128xf32>
    %c0_3 = arith.constant 0 : index
    %c0_4 = arith.constant 0 : index
    %3 = vector.load %arg5[%c0_3, %c0_4] : memref<1x128xf32, #tpu.memory_space<vmem>>, vector<1x128xf32>
    %4 = vector.broadcast %3 : vector<1x128xf32> to vector<16x128xf32>
    %5 = arith.addf %2, %4 : vector<16x128xf32>
    %c0_5 = arith.constant 0 : index
    %c0_6 = arith.constant 0 : index
    %6 = vector.load %arg4[%c0_5, %c0_6] : memref<128x128xf32, #tpu.memory_space<vmem>>, vector<128x128xf32>
    %cst_7 = arith.constant dense<0.000000e+00> : vector<16x128xf32>
    %7 = tpu.matmul %0, %6, %cst_7 {dimension_numbers = #tpu.dot_dimension_numbers<[1], [0], [0], [1], [0, 0, 1, 1], [], []>} : vector<16x128xf32>, vector<128x128xf32>, vector<16x128xf32> -> vector<16x128xf32>
    %c0_8 = arith.constant 0 : index
    %c0_9 = arith.constant 0 : index
    %8 = vector.load %arg6[%c0_8, %c0_9] : memref<1x128xf32, #tpu.memory_space<vmem>>, vector<1x128xf32>
    %9 = vector.broadcast %8 : vector<1x128xf32> to vector<16x128xf32>
    %10 = arith.addf %7, %9 : vector<16x128xf32>
    %cst_10 = arith.constant 5.000000e-01 : f32
    %11 = vector.broadcast %cst_10 : f32 to vector<16x128xf32>
    %12 = arith.mulf %11, %5 : vector<16x128xf32>
    %13 = arith.mulf %12, %10 : vector<16x128xf32>
    %cst_11 = arith.constant 0.707106769 : f32
    %14 = vector.broadcast %cst_11 : f32 to vector<16x128xf32>
    %15 = arith.mulf %10, %14 : vector<16x128xf32>
    %16 = math.erf %15 : vector<16x128xf32>
    %cst_12 = arith.constant 1.000000e+00 : f32
    %17 = vector.broadcast %cst_12 : f32 to vector<16x128xf32>
    %18 = arith.addf %17, %16 : vector<16x128xf32>
    %19 = arith.mulf %13, %18 : vector<16x128xf32>
    %c0_13 = arith.constant 0 : index
    %c0_14 = arith.constant 0 : index
    %20 = vector.load %arg7[%c0_13, %c0_14] : memref<16x128xf32, #tpu.memory_space<vmem>>, vector<16x128xf32>
    tpu.vector_store %arg7[%c0_13, %c0_14], %19 {strides = array<i32>} : memref<16x128xf32, #tpu.memory_space<vmem>>, vector<16x128xf32>,
    return
  }
  func.func @transform_0(%arg0: i32, %arg1: i32) -> (i32, i32) {
    %c0_i32 = arith.constant 0 : i32
    %c0_i32_0 = arith.constant 0 : i32
    return %arg0, %c0_i32 : i32, i32
  }
  func.func @transform_1(%arg0: i32, %arg1: i32) -> (i32, i32) {
    %c0_i32 = arith.constant 0 : i32
    %c0_i32_0 = arith.constant 0 : i32
    return %c0_i32, %arg1 : i32, i32
  }
  func.func @transform_2(%arg0: i32, %arg1: i32) -> (i32, i32) {
    %c1_i32 = arith.constant 1 : i32
    %0 = arith.addi %arg1, %c1_i32 : i32
    %c0_i32 = arith.constant 0 : i32
    %c0_i32_0 = arith.constant 0 : i32
    return %c0_i32, %0 : i32, i32
  }
  func.func @transform_3(%arg0: i32, %arg1: i32) -> (i32, i32) {
    %c0_i32 = arith.constant 0 : i32
    %c0_i32_0 = arith.constant 0 : i32
    return %c0_i32, %arg1 : i32, i32
  }
  func.func @transform_4(%arg0: i32, %arg1: i32) -> (i32, i32) {
    %c1_i32 = arith.constant 1 : i32
    %0 = arith.addi %arg1, %c1_i32 : i32
    %c0_i32 = arith.constant 0 : i32
    %c0_i32_0 = arith.constant 0 : i32
    return %c0_i32, %0 : i32, i32
  }
  func.func @transform_5(%arg0: i32, %arg1: i32) -> (i32, i32) {
    %c0_i32 = arith.constant 0 : i32
    return %arg0, %arg1 : i32, i32
  }
}

</mosaic_0001>

<llo_original>
// kernel: geglu.1
$region0: #{geglu.1}
  #allocation0 [shape = 'u32[]', space=smem, size = 0x4, offset = 0x4, fixed_abs, tag = 'smem constant byte address 0x4 - core index']
  #allocation1 [shape = 'u32[72,128]{1,0:T(1,128)}', space=vmem, size = 0x9000, scoped, tag = 'internal scratch']
  %s0 = inlined_call_operand.vmem [shape: f32[16,128], index: 0, kind: input, shape index: {}]
  %s1 = inlined_call_operand.vmem [shape: f32[128,256], index: 1, kind: input, shape index: {}, may-alias: {1,2}]
  %s2 = inlined_call_operand.vmem [shape: f32[128,256], index: 2, kind: input, shape index: {}, may-alias: {1,2}]
  %s3 = inlined_call_operand.vmem [shape: f32[1,256], index: 3, kind: input, shape index: {}, may-alias: {3,4}]
  %s4 = inlined_call_operand.vmem [shape: f32[1,256], index: 4, kind: input, shape index: {}, may-alias: {3,4}]
  %s5 = inlined_call_operand.vmem [shape: f32[16,128], index: 5, kind: output, shape index: {}]
  %s6 = sld [smem:[#allocation0]]
  $region106: #{geglu.1} parent=0
    _
  %s8 = ssub.s32 1, %s6
  %s9 = scalar_select 0, %s8, %s6
  $region1: #{geglu.1} parent=0
    #allocation2 [shape = 'u8[65536]{0}', space=vmem, size = 0x10000, scoped, tag = 'input window, operand 1, single buffered']
    #allocation3 [shape = 'u8[65536]{0}', space=vmem, size = 0x10000, scoped, tag = 'input window, operand 2, single buffered']
    // Predicated region
    $region2: #{geglu.1} parent=1 // pred_check
      _
    $region3: #{geglu.1} parent=1 // pred_check_branch
      %11 = sbr.rel (0) target = $region5
    $region4: #{geglu.1} parent=1 // pred_region
      _
    $region5: #{geglu.1} parent=1 // pred_fallthru
      _
    // Predicated region
    $region6: #{geglu.1} parent=1 // pred_check
      _
    $region7: #{geglu.1} parent=1 // pred_check_branch
      %13 = sbr.rel (0) target = $region9
    $region8: #{geglu.1} parent=1 // pred_region
      // Predicated region
      $region10: #{geglu.1} parent=8 // pred_check
        _
      $region11: #{geglu.1} parent=8 // pred_check_branch
        %15 = sbr.rel (0) target = $region13
      $region12: #{geglu.1} parent=8 // pred_region
        // Predicated region
        $region14: #{geglu.1} parent=12 // pred_check
          _
        $region15: #{geglu.1} parent=12 // pred_check_branch
          %17 = sbr.rel (0) target = $region17
        $region16: #{geglu.1} parent=12 // pred_region
          // Predicated region
          $region29: #{geglu.1} parent=16 // pred_check
            _
          $region30: #{geglu.1} parent=16 // pred_check_branch
            %63 = sbr.rel (0) target = $region32
          $region31: #{geglu.1} parent=16 // pred_region
            loop: start=0, step=1, limit=1
            $region33: #{geglu.1} parent=31 // loop_pre_header
              _
            $region34: #{geglu.1} parent=31 // loop_header
              %s65 = sphi 0, %s69
              %p66 = scmp.ge.s32.totalorder %s65, 1
              %s70 = sphi %s1, %s1
              %s71 = sphi [#allocation2], [#allocation2]
            $region35: #{geglu.1} parent=31 // loop_header_branch
              %68 = sbr.rel (%p66) target = $region39
            $region36: #{geglu.1} parent=31 // loop_body
              %v72 = vld [vmem:[%s70] sm:$0xff]
              %73 = vst [vmem:[%s71] sm:$0xff] %v72
              %v74 = vld [vmem:[%s70 + $0x10] sm:$0xff]
              %75 = vst [vmem:[%s71 + $0x8] sm:$0xff] %v74
              %v76 = vld [vmem:[%s70 + $0x20] sm:$0xff]
              %77 = vst [vmem:[%s71 + $0x10] sm:$0xff] %v76
              %v78 = vld [vmem:[%s70 + $0x30] sm:$0xff]
              %79 = vst [vmem:[%s71 + $0x18] sm:$0xff] %v78
              %v80 = vld [vmem:[%s70 + $0x40] sm:$0xff]
              %81 = vst [vmem:[%s71 + $0x20] sm:$0xff] %v80
              %v82 = vld [vmem:[%s70 + $0x50] sm:$0xff]
              %83 = vst [vmem:[%s71 + $0x28] sm:$0xff] %v82
              %v84 = vld [vmem:[%s70 + $0x60] sm:$0xff]
              %85 = vst [vmem:[%s71 + $0x30] sm:$0xff] %v84
              %v86 = vld [vmem:[%s70 + $0x70] sm:$0xff]
              %87 = vst [vmem:[%s71 + $0x38] sm:$0xff] %v86
              %v88 = vld [vmem:[%s70 + $0x80] sm:$0xff]
              %89 = vst [vmem:[%s71 + $0x40] sm:$0xff] %v88
              %v90 = vld [vmem:[%s70 + $0x90] sm:$0xff]
              %91 = vst [vmem:[%s71 + $0x48] sm:$0xff] %v90
              %v92 = vld [vmem:[%s70 + $0xa0] sm:$0xff]
              %93 = vst [vmem:[%s71 + $0x50] sm:$0xff] %v92
              %v94 = vld [vmem:[%s70 + $0xb0] sm:$0xff]
              %95 = vst [vmem:[%s71 + $0x58] sm:$0xff] %v94
              %v96 = vld [vmem:[%s70 + $0xc0] sm:$0xff]
              %97 = vst [vmem:[%s71 + $0x60] sm:$0xff] %v96
              %v98 = vld [vmem:[%s70 + $0xd0] sm:$0xff]
              %99 = vst [vmem:[%s71 + $0x68] sm:$0xff] %v98
              %v100 = vld [vmem:[%s70 + $0xe0] sm:$0xff]
              %101 = vst [vmem:[%s71 + $0x70] sm:$0xff] %v100
              %v102 = vld [vmem:[%s70 + $0xf0] sm:$0xff]
              %103 = vst [vmem:[%s71 + $0x78] sm:$0xff] %v102
            $region37: #{geglu.1} parent=31 // loop_footer
              %s69 = sadd.s32 1, %s65
            $region38: #{geglu.1} parent=31 // loop_footer_branch
              %64 = sbr.rel target = $region34
            $region39: #{geglu.1} parent=31 // loop_exit
              _
          $region32: #{geglu.1} parent=16 // pred_fallthru
            _
          // Predicated region
          $region40: #{geglu.1} parent=16 // pred_check
            _
          $region41: #{geglu.1} parent=16 // pred_check_branch
            %105 = sbr.rel target = $region43
          $region42: #{geglu.1} parent=16 // pred_region
            _
          $region43: #{geglu.1} parent=16 // pred_fallthru
            _
        $region17: #{geglu.1} parent=12 // pred_fallthru
          _
        // Predicated region
        $region18: #{geglu.1} parent=12 // pred_check
          _
        $region19: #{geglu.1} parent=12 // pred_check_branch
          %19 = sbr.rel target = $region21
        $region20: #{geglu.1} parent=12 // pred_region
          %s21 = ssub.s32 256, 1
          loop: start=0, step=1, limit=1
          $region22: #{geglu.1} parent=20 // loop_pre_header
            _
          $region23: #{geglu.1} parent=20 // loop_header
            %s23 = sphi 0, %s27
            %p24 = scmp.ge.s32.totalorder %s23, 1
            %s28 = sphi %s1, %s1
            %s29 = sphi [#allocation2], [#allocation2]
          $region24: #{geglu.1} parent=20 // loop_header_branch
            %26 = sbr.rel (%p24) target = $region28
          $region25: #{geglu.1} parent=20 // loop_body
            %v30 = vld [vmem:[%s28] sm:%s21]
            %31 = vst [vmem:[%s29] sm:%s21] %v30
            %v32 = vld [vmem:[%s28 + $0x10] sm:%s21]
            %33 = vst [vmem:[%s29 + $0x8] sm:%s21] %v32
            %v34 = vld [vmem:[%s28 + $0x20] sm:%s21]
            %35 = vst [vmem:[%s29 + $0x10] sm:%s21] %v34
            %v36 = vld [vmem:[%s28 + $0x30] sm:%s21]
            %37 = vst [vmem:[%s29 + $0x18] sm:%s21] %v36
            %v38 = vld [vmem:[%s28 + $0x40] sm:%s21]
            %39 = vst [vmem:[%s29 + $0x20] sm:%s21] %v38
            %v40 = vld [vmem:[%s28 + $0x50] sm:%s21]
            %41 = vst [vmem:[%s29 + $0x28] sm:%s21] %v40
            %v42 = vld [vmem:[%s28 + $0x60] sm:%s21]
            %43 = vst [vmem:[%s29 + $0x30] sm:%s21] %v42
            %v44 = vld [vmem:[%s28 + $0x70] sm:%s21]
            %45 = vst [vmem:[%s29 + $0x38] sm:%s21] %v44
            %v46 = vld [vmem:[%s28 + $0x80] sm:%s21]
            %47 = vst [vmem:[%s29 + $0x40] sm:%s21] %v46
            %v48 = vld [vmem:[%s28 + $0x90] sm:%s21]
            %49 = vst [vmem:[%s29 + $0x48] sm:%s21] %v48
            %v50 = vld [vmem:[%s28 + $0xa0] sm:%s21]
            %51 = vst [vmem:[%s29 + $0x50] sm:%s21] %v50
            %v52 = vld [vmem:[%s28 + $0xb0] sm:%s21]
            %53 = vst [vmem:[%s29 + $0x58] sm:%s21] %v52
            %v54 = vld [vmem:[%s28 + $0xc0] sm:%s21]
            %55 = vst [vmem:[%s29 + $0x60] sm:%s21] %v54
            %v56 = vld [vmem:[%s28 + $0xd0] sm:%s21]
            %57 = vst [vmem:[%s29 + $0x68] sm:%s21] %v56
            %v58 = vld [vmem:[%s28 + $0xe0] sm:%s21]
            %59 = vst [vmem:[%s29 + $0x70] sm:%s21] %v58
            %v60 = vld [vmem:[%s28 + $0xf0] sm:%s21]
            %61 = vst [vmem:[%s29 + $0x78] sm:%s21] %v60
          $region26: #{geglu.1} parent=20 // loop_footer
            %s27 = sadd.s32 1, %s23
          $region27: #{geglu.1} parent=20 // loop_footer_branch
            %22 = sbr.rel target = $region23
          $region28: #{geglu.1} parent=20 // loop_exit
            _
        $region21: #{geglu.1} parent=12 // pred_fallthru
          _
      $region13: #{geglu.1} parent=8 // pred_fallthru
        _
      %106 = vnop
    $region9: #{geglu.1} parent=1 // pred_fallthru
      _
    // Predicated region
    $region44: #{geglu.1} parent=1 // pred_check
      _
    $region45: #{geglu.1} parent=1 // pred_check_branch
      %108 = sbr.rel (0) target = $region47
    $region46: #{geglu.1} parent=1 // pred_region
      %s109 = sadd.s32 0, 1
      %s110 = smul.addr %s109, 8
      %s111 = scalar_lea.vmem %s2, %s110
      // Predicated region
      $region48: #{geglu.1} parent=46 // pred_check
        _
      $region49: #{geglu.1} parent=46 // pred_check_branch
        %113 = sbr.rel (0) target = $region51
      $region50: #{geglu.1} parent=46 // pred_region
        // Predicated region
        $region52: #{geglu.1} parent=50 // pred_check
          _
        $region53: #{geglu.1} parent=50 // pred_check_branch
          %115 = sbr.rel (0) target = $region55
        $region54: #{geglu.1} parent=50 // pred_region
          // Predicated region
          $region67: #{geglu.1} parent=54 // pred_check
            _
          $region68: #{geglu.1} parent=54 // pred_check_branch
            %161 = sbr.rel (0) target = $region70
          $region69: #{geglu.1} parent=54 // pred_region
            loop: start=0, step=1, limit=1
            $region71: #{geglu.1} parent=69 // loop_pre_header
              _
            $region72: #{geglu.1} parent=69 // loop_header
              %s163 = sphi 0, %s167
              %p164 = scmp.ge.s32.totalorder %s163, 1
              %s168 = sphi %s111, %s111
              %s169 = sphi [#allocation3], [#allocation3]
            $region73: #{geglu.1} parent=69 // loop_header_branch
              %166 = sbr.rel (%p164) target = $region77
            $region74: #{geglu.1} parent=69 // loop_body
              %v170 = vld [vmem:[%s168] sm:$0xff]
              %171 = vst [vmem:[%s169] sm:$0xff] %v170
              %v172 = vld [vmem:[%s168 + $0x10] sm:$0xff]
              %173 = vst [vmem:[%s169 + $0x8] sm:$0xff] %v172
              %v174 = vld [vmem:[%s168 + $0x20] sm:$0xff]
              %175 = vst [vmem:[%s169 + $0x10] sm:$0xff] %v174
              %v176 = vld [vmem:[%s168 + $0x30] sm:$0xff]
              %177 = vst [vmem:[%s169 + $0x18] sm:$0xff] %v176
              %v178 = vld [vmem:[%s168 + $0x40] sm:$0xff]
              %179 = vst [vmem:[%s169 + $0x20] sm:$0xff] %v178
              %v180 = vld [vmem:[%s168 + $0x50] sm:$0xff]
              %181 = vst [vmem:[%s169 + $0x28] sm:$0xff] %v180
              %v182 = vld [vmem:[%s168 + $0x60] sm:$0xff]
              %183 = vst [vmem:[%s169 + $0x30] sm:$0xff] %v182
              %v184 = vld [vmem:[%s168 + $0x70] sm:$0xff]
              %185 = vst [vmem:[%s169 + $0x38] sm:$0xff] %v184
              %v186 = vld [vmem:[%s168 + $0x80] sm:$0xff]
              %187 = vst [vmem:[%s169 + $0x40] sm:$0xff] %v186
              %v188 = vld [vmem:[%s168 + $0x90] sm:$0xff]
              %189 = vst [vmem:[%s169 + $0x48] sm:$0xff] %v188
              %v190 = vld [vmem:[%s168 + $0xa0] sm:$0xff]
              %191 = vst [vmem:[%s169 + $0x50] sm:$0xff] %v190
              %v192 = vld [vmem:[%s168 + $0xb0] sm:$0xff]
              %193 = vst [vmem:[%s169 + $0x58] sm:$0xff] %v192
              %v194 = vld [vmem:[%s168 + $0xc0] sm:$0xff]
              %195 = vst [vmem:[%s169 + $0x60] sm:$0xff] %v194
              %v196 = vld [vmem:[%s168 + $0xd0] sm:$0xff]
              %197 = vst [vmem:[%s169 + $0x68] sm:$0xff] %v196
              %v198 = vld [vmem:[%s168 + $0xe0] sm:$0xff]
              %199 = vst [vmem:[%s169 + $0x70] sm:$0xff] %v198
              %v200 = vld [vmem:[%s168 + $0xf0] sm:$0xff]
              %201 = vst [vmem:[%s169 + $0x78] sm:$0xff] %v200
            $region75: #{geglu.1} parent=69 // loop_footer
              %s167 = sadd.s32 1, %s163
            $region76: #{geglu.1} parent=69 // loop_footer_branch
              %162 = sbr.rel target = $region72
            $region77: #{geglu.1} parent=69 // loop_exit
              _
          $region70: #{geglu.1} parent=54 // pred_fallthru
            _
          // Predicated region
          $region78: #{geglu.1} parent=54 // pred_check
            _
          $region79: #{geglu.1} parent=54 // pred_check_branch
            %203 = sbr.rel target = $region81
          $region80: #{geglu.1} parent=54 // pred_region
            _
          $region81: #{geglu.1} parent=54 // pred_fallthru
            _
        $region55: #{geglu.1} parent=50 // pred_fallthru
          _
        // Predicated region
        $region56: #{geglu.1} parent=50 // pred_check
          _
        $region57: #{geglu.1} parent=50 // pred_check_branch
          %117 = sbr.rel target = $region59
        $region58: #{geglu.1} parent=50 // pred_region
          %s119 = ssub.s32 256, 1
          loop: start=0, step=1, limit=1
          $region60: #{geglu.1} parent=58 // loop_pre_header
            _
          $region61: #{geglu.1} parent=58 // loop_header
            %s121 = sphi 0, %s125
            %p122 = scmp.ge.s32.totalorder %s121, 1
            %s126 = sphi %s111, %s111
            %s127 = sphi [#allocation3], [#allocation3]
          $region62: #{geglu.1} parent=58 // loop_header_branch
            %124 = sbr.rel (%p122) target = $region66
          $region63: #{geglu.1} parent=58 // loop_body
            %v128 = vld [vmem:[%s126] sm:%s119]
            %129 = vst [vmem:[%s127] sm:%s119] %v128
            %v130 = vld [vmem:[%s126 + $0x10] sm:%s119]
            %131 = vst [vmem:[%s127 + $0x8] sm:%s119] %v130
            %v132 = vld [vmem:[%s126 + $0x20] sm:%s119]
            %133 = vst [vmem:[%s127 + $0x10] sm:%s119] %v132
            %v134 = vld [vmem:[%s126 + $0x30] sm:%s119]
            %135 = vst [vmem:[%s127 + $0x18] sm:%s119] %v134
            %v136 = vld [vmem:[%s126 + $0x40] sm:%s119]
            %137 = vst [vmem:[%s127 + $0x20] sm:%s119] %v136
            %v138 = vld [vmem:[%s126 + $0x50] sm:%s119]
            %139 = vst [vmem:[%s127 + $0x28] sm:%s119] %v138
            %v140 = vld [vmem:[%s126 + $0x60] sm:%s119]
            %141 = vst [vmem:[%s127 + $0x30] sm:%s119] %v140
            %v142 = vld [vmem:[%s126 + $0x70] sm:%s119]
            %143 = vst [vmem:[%s127 + $0x38] sm:%s119] %v142
            %v144 = vld [vmem:[%s126 + $0x80] sm:%s119]
            %145 = vst [vmem:[%s127 + $0x40] sm:%s119] %v144
            %v146 = vld [vmem:[%s126 + $0x90] sm:%s119]
            %147 = vst [vmem:[%s127 + $0x48] sm:%s119] %v146
            %v148 = vld [vmem:[%s126 + $0xa0] sm:%s119]
            %149 = vst [vmem:[%s127 + $0x50] sm:%s119] %v148
            %v150 = vld [vmem:[%s126 + $0xb0] sm:%s119]
            %151 = vst [vmem:[%s127 + $0x58] sm:%s119] %v150
            %v152 = vld [vmem:[%s126 + $0xc0] sm:%s119]
            %153 = vst [vmem:[%s127 + $0x60] sm:%s119] %v152
            %v154 = vld [vmem:[%s126 + $0xd0] sm:%s119]
            %155 = vst [vmem:[%s127 + $0x68] sm:%s119] %v154
            %v156 = vld [vmem:[%s126 + $0xe0] sm:%s119]
            %157 = vst [vmem:[%s127 + $0x70] sm:%s119] %v156
            %v158 = vld [vmem:[%s126 + $0xf0] sm:%s119]
            %159 = vst [vmem:[%s127 + $0x78] sm:%s119] %v158
          $region64: #{geglu.1} parent=58 // loop_footer
            %s125 = sadd.s32 1, %s121
          $region65: #{geglu.1} parent=58 // loop_footer_branch
            %120 = sbr.rel target = $region61
          $region66: #{geglu.1} parent=58 // loop_exit
            _
        $region59: #{geglu.1} parent=50 // pred_fallthru
          _
      $region51: #{geglu.1} parent=46 // pred_fallthru
        _
      %204 = vnop
    $region47: #{geglu.1} parent=1 // pred_fallthru
      _
    // Predicated region
    $region82: #{geglu.1} parent=1 // pred_check
      _
    $region83: #{geglu.1} parent=1 // pred_check_branch
      %206 = sbr.rel (0) target = $region85
    $region84: #{geglu.1} parent=1 // pred_region
      _
    $region85: #{geglu.1} parent=1 // pred_fallthru
      _
    // Predicated region
    $region86: #{geglu.1} parent=1 // pred_check
      _
    $region87: #{geglu.1} parent=1 // pred_check_branch
      %208 = sbr.rel (0) target = $region89
    $region88: #{geglu.1} parent=1 // pred_region
      %s209 = sadd.s32 0, 1
      %p210 = scmp.lt.s32.totalorder %s209, 1
      %s211 = scalar_select %p210, %s209, 1
      %s212 = scalar_lea.vmem %s4, %s211
      %s213 = sadd.s32 0, 1
    $region89: #{geglu.1} parent=1 // pred_fallthru
      _
    // Predicated region
    $region90: #{geglu.1} parent=1 // pred_check
      _
    $region91: #{geglu.1} parent=1 // pred_check_branch
      %215 = sbr.rel (0) target = $region93
    $region92: #{geglu.1} parent=1 // pred_region
      _
    $region93: #{geglu.1} parent=1 // pred_fallthru
      _
    // Predicated region
    $region94: #{geglu.1} parent=1 // pred_check
      _
    $region95: #{geglu.1} parent=1 // pred_check_branch
      %217 = sbr.rel (0) target = $region97
    $region96: #{geglu.1} parent=1 // pred_region
      _
    $region97: #{geglu.1} parent=1 // pred_fallthru
      _
    %s218 = sadd.s32 0, 1
    %p219 = scmp.lt.s32.totalorder %s218, 1
    %s220 = scalar_select %p219, %s218, 1
    %s221 = scalar_lea.vmem %s4, %s220
    %s222 = sadd.s32 0, 1
    %s223 = sadd.s32 0, 1
    %p224 = scmp.lt.s32.totalorder %s223, 1
    %s225 = scalar_select %p224, %s223, 1
    %s226 = scalar_lea.vmem %s4, %s225
    %s227 = sadd.s32 0, 1
    %v228 = vld [vmem:[%s0] sm:$0xff]
    %v229 = vld [vmem:[%s0 + $0x8] sm:$0xff]
    %v230 = vld [vmem:[#allocation2] sm:$0xff]
    %v231 = vld [vmem:[#allocation2 + $0x8] sm:$0xff]
    %v232 = vld [vmem:[#allocation2 + $0x10] sm:$0xff]
    %v233 = vld [vmem:[#allocation2 + $0x18] sm:$0xff]
    %v234 = vld [vmem:[#allocation2 + $0x20] sm:$0xff]
    %v235 = vld [vmem:[#allocation2 + $0x28] sm:$0xff]
    %v236 = vld [vmem:[#allocation2 + $0x30] sm:$0xff]
    %v237 = vld [vmem:[#allocation2 + $0x38] sm:$0xff]
    %v238 = vld [vmem:[#allocation2 + $0x40] sm:$0xff]
    %v239 = vld [vmem:[#allocation2 + $0x48] sm:$0xff]
    %v240 = vld [vmem:[#allocation2 + $0x50] sm:$0xff]
    %v241 = vld [vmem:[#allocation2 + $0x58] sm:$0xff]
    %v242 = vld [vmem:[#allocation2 + $0x60] sm:$0xff]
    %v243 = vld [vmem:[#allocation2 + $0x68] sm:$0xff]
    %v244 = vld [vmem:[#allocation2 + $0x70] sm:$0xff]
    %v245 = vld [vmem:[#allocation2 + $0x78] sm:$0xff]
    %v246 = vld [vmem:[%s3] sm:$0x1]
    %v248 = vperm.slane %v246, 0
    %250 = vmatpush.msra.mxu0 %v245
    %251 = vmatpush.msra.mxu0 %v244
    %252 = vmatpush.msra.mxu0 %v243
    %253 = vmatpush.msra.mxu0 %v242
    %254 = vmatpush.msra.mxu0 %v241
    %255 = vmatpush.msra.mxu0 %v240
    %256 = vmatpush.msra.mxu0 %v239
    %257 = vmatpush.msra.mxu0 %v238
    %258 = vmatpush.msra.mxu0 %v237
    %259 = vmatpush.msra.mxu0 %v236
    %260 = vmatpush.msra.mxu0 %v235
    %261 = vmatpush.msra.mxu0 %v234
    %262 = vmatpush.msra.mxu0 %v233
    %263 = vmatpush.msra.mxu0 %v232
    %264 = vmatpush.msra.mxu0 %v231
    %265 = vmatpush.msra.mxu0 %v230
    %266 = vmatmul.f32.gmra.mxu0 %v228
    %v267 = vpop.f32.mrf.mxu0
    %v268 = vadd.f32 %v248, %v267
    %269 = vmatmul.f32.gmra.mxu0 %v229
    %v270 = vpop.f32.mrf.mxu0
    %v271 = vadd.f32 %v248, %v270
    %272 = vdwg.mxu0
    %v273 = vld [vmem:[#allocation3] sm:$0xff]
    %v274 = vld [vmem:[#allocation3 + $0x8] sm:$0xff]
    %v275 = vld [vmem:[#allocation3 + $0x10] sm:$0xff]
    %v276 = vld [vmem:[#allocation3 + $0x18] sm:$0xff]
    %v277 = vld [vmem:[#allocation3 + $0x20] sm:$0xff]
    %v278 = vld [vmem:[#allocation3 + $0x28] sm:$0xff]
    %v279 = vld [vmem:[#allocation3 + $0x30] sm:$0xff]
    %v280 = vld [vmem:[#allocation3 + $0x38] sm:$0xff]
    %v281 = vld [vmem:[#allocation3 + $0x40] sm:$0xff]
    %v282 = vld [vmem:[#allocation3 + $0x48] sm:$0xff]
    %v283 = vld [vmem:[#allocation3 + $0x50] sm:$0xff]
    %v284 = vld [vmem:[#allocation3 + $0x58] sm:$0xff]
    %v285 = vld [vmem:[#allocation3 + $0x60] sm:$0xff]
    %v286 = vld [vmem:[#allocation3 + $0x68] sm:$0xff]
    %v287 = vld [vmem:[#allocation3 + $0x70] sm:$0xff]
    %v288 = vld [vmem:[#allocation3 + $0x78] sm:$0xff]
    %v289 = vld [vmem:[%s226] sm:$0x1]
    %v291 = vperm.slane %v289, 0
    %293 = vmatpush.msra.mxu0 %v288
    %294 = vmatpush.msra.mxu0 %v287
    %295 = vmatpush.msra.mxu0 %v286
    %296 = vmatpush.msra.mxu0 %v285
    %297 = vmatpush.msra.mxu0 %v284
    %298 = vmatpush.msra.mxu0 %v283
    %299 = vmatpush.msra.mxu0 %v282
    %300 = vmatpush.msra.mxu0 %v281
    %301 = vmatpush.msra.mxu0 %v280
    %302 = vmatpush.msra.mxu0 %v279
    %303 = vmatpush.msra.mxu0 %v278
    %304 = vmatpush.msra.mxu0 %v277
    %305 = vmatpush.msra.mxu0 %v276
    %306 = vmatpush.msra.mxu0 %v275
    %307 = vmatpush.msra.mxu0 %v274
    %308 = vmatpush.msra.mxu0 %v273
    %309 = vmatmul.f32.gmra.mxu0 %v228
    %v310 = vpop.f32.mrf.mxu0
    %v311 = vadd.f32 %v291, %v310
    %312 = vmatmul.f32.gmra.mxu0 %v229
    %v313 = vpop.f32.mrf.mxu0
    %v314 = vadd.f32 %v291, %v313
    %315 = vdwg.mxu0
    %v316 = vmul.f32 %v268, 0.5
    %v317 = vmul.f32 %v271, 0.5
    %v318 = vmul.f32 %v316, %v311
    %v319 = vmul.f32 %v317, %v314
    %v320 = vmul.f32 %v311, 0.70710677
    %v321 = vmul.f32 %v314, 0.70710677
    %v322 = vmul.f32 %v320, %v320
    %v323 = vmin.f32 16.0, %v322
    %v324 = vmul.f32 %v323, 2.1237322e-06
    %v325 = vadd.f32 %v324, 0.00028619796
    %v326 = vmul.f32 %v323, %v325
    %v327 = vadd.f32 %v326, 0.0036580483
    %v328 = vmul.f32 %v323, %v327
    %v329 = vadd.f32 %v328, 0.05243302
    %v330 = vmul.f32 %v323, %v329
    %v331 = vadd.f32 %v330, 0.18741608
    %v332 = vmul.f32 %v323, %v331
    %v333 = vadd.f32 %v332, 1.1283791
    %v334 = vmul.f32 %v320, %v333
    %v335 = vmul.f32 %v323, 3.8918573e-05
    %v336 = vadd.f32 %v335, 0.001143296
    %v337 = vmul.f32 %v323, %v336
    %v338 = vadd.f32 %v337, 0.014752088
    %v339 = vmul.f32 %v323, %v338
    %v340 = vadd.f32 %v339, 0.112945676
    %v341 = vmul.f32 %v323, %v340
    %v342 = vadd.f32 %v341, 0.4994258
    %v343 = vmul.f32 %v323, %v342
    %v344 = vadd.f32 %v343, 1.0
    %v345 = vrcp.pop %v344
    %v346 = vmul.f32 %v344, %v345
    %v347 = vsub.f32 1.0, %v346
    %v348 = vmul.f32 %v345, %v347
    %v349 = vadd.f32 %v345, %v348
    %vm350 = vweird.f32 %v344
    %vm351 = vweird.f32 %v345
    %vm352 = vmor %vm350, %vm351
    %v353 = vsel %vm352, %v345, %v349
    %v354 = vand.u32 2147483647, %v344
    %vm355 = vcmp.eq.f32.partialorder %v354, 8.507059e+37
    %v356 = vand.u32 %v344, 2147483648
    %v357 = vor.u32 1.1754944e-38, %v356
    %v358 = vsel %vm355, %v357, %v353
    %v359 = vmul.f32 %v334, %v358
    %v360 = vmin.f32 %v359, 1.0
    %v361 = vmax.f32 %v360, -1.0
    %v362 = vmul.f32 %v321, %v321
    %v363 = vmin.f32 16.0, %v362
    %v364 = vmul.f32 %v363, 2.1237322e-06
    %v365 = vadd.f32 %v364, 0.00028619796
    %v366 = vmul.f32 %v363, %v365
    %v367 = vadd.f32 %v366, 0.0036580483
    %v368 = vmul.f32 %v363, %v367
    %v369 = vadd.f32 %v368, 0.05243302
    %v370 = vmul.f32 %v363, %v369
    %v371 = vadd.f32 %v370, 0.18741608
    %v372 = vmul.f32 %v363, %v371
    %v373 = vadd.f32 %v372, 1.1283791
    %v374 = vmul.f32 %v321, %v373
    %v375 = vmul.f32 %v363, 3.8918573e-05
    %v376 = vadd.f32 %v375, 0.001143296
    %v377 = vmul.f32 %v363, %v376
    %v378 = vadd.f32 %v377, 0.014752088
    %v379 = vmul.f32 %v363, %v378
    %v380 = vadd.f32 %v379, 0.112945676
    %v381 = vmul.f32 %v363, %v380
    %v382 = vadd.f32 %v381, 0.4994258
    %v383 = vmul.f32 %v363, %v382
    %v384 = vadd.f32 %v383, 1.0
    %v385 = vrcp.pop %v384
    %v386 = vmul.f32 %v384, %v385
    %v387 = vsub.f32 1.0, %v386
    %v388 = vmul.f32 %v385, %v387
    %v389 = vadd.f32 %v385, %v388
    %vm390 = vweird.f32 %v384
    %vm391 = vweird.f32 %v385
    %vm392 = vmor %vm390, %vm391
    %v393 = vsel %vm392, %v385, %v389
    %v394 = vand.u32 2147483647, %v384
    %vm395 = vcmp.eq.f32.partialorder %v394, 8.507059e+37
    %v396 = vand.u32 %v384, 2147483648
    %v397 = vor.u32 1.1754944e-38, %v396
    %v398 = vsel %vm395, %v397, %v393
    %v399 = vmul.f32 %v374, %v398
    %v400 = vmin.f32 %v399, 1.0
    %v401 = vmax.f32 %v400, -1.0
    %v402 = vadd.f32 %v361, 1.0
    %v403 = vadd.f32 %v401, 1.0
    %v404 = vmul.f32 %v318, %v402
    %v405 = vmul.f32 %v319, %v403
    %406 = vst [vmem:[%s5] sm:$0xff] %v404
    %407 = vst [vmem:[%s5 + $0x8] sm:$0xff] %v405
    // Predicated region
    $region98: #{geglu.1} parent=1 // pred_check
      _
    $region99: #{geglu.1} parent=1 // pred_check_branch
      %409 = sbr.rel (0) target = $region101
    $region100: #{geglu.1} parent=1 // pred_region
      _
    $region101: #{geglu.1} parent=1 // pred_fallthru
      _
    // Predicated region
    $region102: #{geglu.1} parent=1 // pred_check
      _
    $region103: #{geglu.1} parent=1 // pred_check_branch
      %411 = sbr.rel (0) target = $region105
    $region104: #{geglu.1} parent=1 // pred_region
      _
    $region105: #{geglu.1} parent=1 // pred_fallthru
      _

</llo_original>
